<compile_context>
chip_gen: v7x
topology: tpu7x:2x2x1
jax: 0.10.0
libtpu: 0.0.40
codegen_flags: <defaults>
</compile_context>

<pallas_src>
import jax
import jax.numpy as jnp
from jax.experimental import pallas as pl
from jax.experimental.pallas import tpu as pltpu

LATENT_DIM = 2
N_FEATURES = 28 * 28   # 784
N_HIDDEN_1 = 128
N_HIDDEN_2 = 64
OUT_W = 2 * LATENT_DIM  # fused output: mean lanes [0:2], var lanes [2:4]


def _round_up(n, m):
    return ((n + m - 1) // m) * m


def encoder_kernel(x_ref, w1_ref, b1_ref, w2_ref, b2_ref, wmv_ref, bmv_ref,
                   out_ref):
    # Matmul compute dtype follows the weight dtype (f32 or bf16); x follows
    # whatever dtype it was produced in.  Accumulation is always f32, biases
    # and activations stay f32.
    cdt = w1_ref.dtype
    x = x_ref[...].astype(cdt)                               # (TB, 784)

    # fc1 + sigmoid  (MXU matmul, EUP sigmoid)
    h1 = jnp.dot(x, w1_ref[...], preferred_element_type=jnp.float32) + b1_ref[...]
    f1 = jax.nn.sigmoid(h1)                                   # (TB, 128) f32

    # fc2 + sigmoid
    h2 = jnp.dot(f1.astype(cdt), w2_ref[...],
                 preferred_element_type=jnp.float32) + b2_ref[...]
    f2 = jax.nn.sigmoid(h2)                                   # (TB, 64) f32

    # Fused mean/var head: one tiny matmul into a (TB, 4) block.
    y = jnp.dot(f2.astype(cdt), wmv_ref[...],
                preferred_element_type=jnp.float32) + bmv_ref[...]
    lane = jax.lax.broadcasted_iota(jnp.int32, y.shape, 1)
    # lanes [0, LATENT_DIM): mean (identity); lanes [LATENT_DIM, 2*LATENT_DIM): sigmoid.
    out_ref[...] = jnp.where(lane < LATENT_DIM, y, jax.nn.sigmoid(y))


def pack_params(params, *, use_bf16=False):
    """One-time weight prep: fuse the two tiny heads and (optionally) cast
    weights to bf16.  Keep this OUT of the per-call forward path."""
    wdt = jnp.bfloat16 if use_bf16 else jnp.float32
    wmv = jnp.concatenate([params["wm"], params["wv"]], axis=1)   # (64, 4)
    bmv = jnp.concatenate([params["bm"], params["bv"]], axis=1)   # (1, 4)
    return dict(
        w1=params["w1"].astype(wdt), b1=params["b1"],
        w2=params["w2"].astype(wdt), b2=params["b2"],
        wmv=wmv.astype(wdt), bmv=bmv,
    )


def encoder_forward(x, packed, *, batch_tile=1024, min_grid_steps=2):
    """x: [B, 784] float32 or bfloat16 (bf16 halves the dominant HBM read).
    packed: output of pack_params().  Returns dict(mean=[B,2], var=[B,2]) f32."""
    B, F = x.shape
    assert F == N_FEATURES

    # Tile: as large as useful for DMA saturation, sublane (8) aligned, and —
    # when the batch is large enough — split into >= min_grid_steps blocks so
    # the "parallel" axis can shard across v7x's 2 TensorCores.
    b8 = _round_up(B, 8)
    tile = min(batch_tile, b8)
    if b8 // tile < min_grid_steps and b8 >= min_grid_steps * 8:
        tile = _round_up(pl.cdiv(b8, min_grid_steps), 8)

    grid = (pl.cdiv(B, tile),)   # ragged last block handled by Pallas (no jnp.pad)

    # Weights/biases are small; full-array blocks with constant index_map stay
    # resident in VMEM (fetched once, not re-DMA'd per grid step).
    def full(shape):
        return pl.BlockSpec(shape, lambda i: tuple(0 for _ in shape))

    out = pl.pallas_call(
        encoder_kernel,
        out_shape=jax.ShapeDtypeStruct((B, OUT_W), jnp.float32),
        grid_spec=pltpu.PrefetchScalarGridSpec(
            num_scalar_prefetch=0,
            grid=grid,
            in_specs=[
                pl.BlockSpec((tile, N_FEATURES), lambda i: (i, 0)),  # x
                full((N_FEATURES, N_HIDDEN_1)),                      # w1
                full((1, N_HIDDEN_1)),                               # b1
                full((N_HIDDEN_1, N_HIDDEN_2)),                      # w2
                full((1, N_HIDDEN_2)),                               # b2
                full((N_HIDDEN_2, OUT_W)),                           # wmv (fused)
                full((1, OUT_W)),                                    # bmv (fused)
            ],
            out_specs=pl.BlockSpec((tile, OUT_W), lambda i: (i, 0)),
        ),
        compiler_params=pltpu.CompilerParams(
            dimension_semantics=("parallel",),
            vmem_limit_bytes=32 * 1024 * 1024,   # headroom for tile=1024 on v5e
        ),
    )(x, packed["w1"], packed["b1"], packed["w2"], packed["b2"],
      packed["wmv"], packed["bmv"])

    return {"mean": out[:, :LATENT_DIM], "var": out[:, LATENT_DIM:2 * LATENT_DIM]}


def init_params(key):
    """Deterministic init mimicking torch.nn.Linear's U(-1/sqrt(in), 1/sqrt(in))."""
    def linear(key, fan_in, fan_out):
        kw, kb = jax.random.split(key)
        bound = 1.0 / jnp.sqrt(fan_in)
        w = jax.random.uniform(kw, (fan_in, fan_out), jnp.float32, -bound, bound)
        b = jax.random.uniform(kb, (1, fan_out), jnp.float32, -bound, bound)
        return w, b

    k1, k2, k3, k4 = jax.random.split(key, 4)
    w1, b1 = linear(k1, N_FEATURES, N_HIDDEN_1)
    w2, b2 = linear(k2, N_HIDDEN_1, N_HIDDEN_2)
    wm, bm = linear(k3, N_HIDDEN_2, LATENT_DIM)
    wv, bv = linear(k4, N_HIDDEN_2, LATENT_DIM)
    return dict(w1=w1, b1=b1, w2=w2, b2=b2, wm=wm, bm=bm, wv=wv, bv=bv)


def encoder_forward_ref(x, p):
    f1 = jax.nn.sigmoid(x @ p["w1"] + p["b1"])
    f2 = jax.nn.sigmoid(f1 @ p["w2"] + p["b2"])
    return {"mean": f2 @ p["wm"] + p["bm"],
            "var": jax.nn.sigmoid(f2 @ p["wv"] + p["bv"])}


if __name__ == "__main__":
    key = jax.random.PRNGKey(0)
    kx, kx2, kp = jax.random.split(key, 3)
    params = init_params(kp)

    # --- exact f32 path, small batch (matches PyTorch module semantics) ---
    B = 8
    x = jax.random.normal(kx, (B, N_FEATURES), jnp.float32)
    packed_f32 = pack_params(params)                 # one-time prep
    out = encoder_forward(x, packed_f32)
    jax.block_until_ready(out)
    ref = encoder_forward_ref(x, params)
    assert jnp.allclose(out["mean"], ref["mean"], atol=1e-5, rtol=1e-5)
    assert jnp.allclose(out["var"], ref["var"], atol=1e-5, rtol=1e-5)
    assert out["mean"].shape == (B, LATENT_DIM)
    assert out["var"].shape == (B, LATENT_DIM)

    # --- larger non-divisible batch: multi-step grid with a ragged last block,
    #     bf16 x straight from the "producer" (halves the dominant HBM read),
    #     bf16 weights (f32 accumulation in-kernel) ---
    B2 = 200
    x2_f32 = jax.random.normal(kx2, (B2, N_FEATURES), jnp.float32)
    x2_bf16 = x2_f32.astype(jnp.bfloat16)            # simulates upstream emitting bf16
    packed_bf16 = pack_params(params, use_bf16=True)  # one-time prep
    out2 = encoder_forward(x2_bf16, packed_bf16, batch_tile=64)
    jax.block_until_ready(out2)
    ref2 = encoder_forward_ref(x2_f32, params)
    assert jnp.allclose(out2["mean"], ref2["mean"], atol=5e-2, rtol=5e-2)
    assert jnp.allclose(out2["var"], ref2["var"], atol=5e-2, rtol=5e-2)
    assert out2["mean"].shape == (B2, LATENT_DIM)
    assert out2["var"].shape == (B2, LATENT_DIM)

    print("KERNEL_OK")
</pallas_src>

<mosaic_0001>
module attributes {stable_mosaic.version = 11 : i64} {
  func.func @encoder_kernel(%arg0: i32, %arg1: memref<8x784xf32, #tpu.memory_space<vmem>>, %arg2: memref<784x128xf32, #tpu.memory_space<vmem>>, %arg3: memref<1x128xf32, #tpu.memory_space<vmem>>, %arg4: memref<128x64xf32, #tpu.memory_space<vmem>>, %arg5: memref<1x64xf32, #tpu.memory_space<vmem>>, %arg6: memref<64x4xf32, #tpu.memory_space<vmem>>, %arg7: memref<1x4xf32, #tpu.memory_space<vmem>>, %arg8: memref<8x4xf32, #tpu.memory_space<vmem>>) attributes {dimension_semantics = [#tpu.dimension_semantics<parallel>], iteration_bounds = array<i64: 1>, scalar_prefetch = 0 : i64, scratch_operands = 0 : i64, tpu.core_type = #tpu.core_type<tc>, window_params = [{transform_indices = @transform_0, window_bounds = array<i64: 8, 784>}, {pipeline_mode = #tpu.pipeline_mode<synchronous>, transform_indices = @transform_1, window_bounds = array<i64: 784, 128>}, {pipeline_mode = #tpu.pipeline_mode<synchronous>, transform_indices = @transform_2, window_bounds = array<i64: 1, 128>}, {pipeline_mode = #tpu.pipeline_mode<synchronous>, transform_indices = @transform_3, window_bounds = array<i64: 128, 64>}, {pipeline_mode = #tpu.pipeline_mode<synchronous>, transform_indices = @transform_4, window_bounds = array<i64: 1, 64>}, {pipeline_mode = #tpu.pipeline_mode<synchronous>, transform_indices = @transform_5, window_bounds = array<i64: 64, 4>}, {pipeline_mode = #tpu.pipeline_mode<synchronous>, transform_indices = @transform_6, window_bounds = array<i64: 1, 4>}, {transform_indices = @transform_7, window_bounds = array<i64: 8, 4>}]} {
    %c0 = arith.constant 0 : index
    %c0_0 = arith.constant 0 : index
    %0 = vector.load %arg1[%c0, %c0_0] : memref<8x784xf32, #tpu.memory_space<vmem>>, vector<8x784xf32>
    %c0_1 = arith.constant 0 : index
    %c0_2 = arith.constant 0 : index
    %1 = vector.load %arg2[%c0_1, %c0_2] : memref<784x128xf32, #tpu.memory_space<vmem>>, vector<784x128xf32>
    %cst = arith.constant dense<0.000000e+00> : vector<8x128xf32>
    %2 = tpu.matmul %0, %1, %cst {dimension_numbers = #tpu.dot_dimension_numbers<[1], [0], [0], [1], [0, 0, 1, 1], [], []>} : vector<8x784xf32>, vector<784x128xf32>, vector<8x128xf32> -> vector<8x128xf32>
    %c0_3 = arith.constant 0 : index
    %c0_4 = arith.constant 0 : index
    %3 = vector.load %arg3[%c0_3, %c0_4] : memref<1x128xf32, #tpu.memory_space<vmem>>, vector<1x128xf32>
    %4 = vector.broadcast %3 : vector<1x128xf32> to vector<8x128xf32>
    %5 = arith.addf %2, %4 : vector<8x128xf32>
    %6 = arith.negf %5 : vector<8x128xf32>
    %7 = math.exp %6 : vector<8x128xf32>
    %cst_5 = arith.constant 1.000000e+00 : f32
    %8 = vector.broadcast %cst_5 : f32 to vector<8x128xf32>
    %9 = arith.addf %8, %7 : vector<8x128xf32>
    %10 = arith.divf %8, %9 : vector<8x128xf32>
    %c0_6 = arith.constant 0 : index
    %c0_7 = arith.constant 0 : index
    %11 = vector.load %arg4[%c0_6, %c0_7] : memref<128x64xf32, #tpu.memory_space<vmem>>, vector<128x64xf32>
    %cst_8 = arith.constant dense<0.000000e+00> : vector<8x64xf32>
    %12 = tpu.matmul %10, %11, %cst_8 {dimension_numbers = #tpu.dot_dimension_numbers<[1], [0], [0], [1], [0, 0, 1, 1], [], []>} : vector<8x128xf32>, vector<128x64xf32>, vector<8x64xf32> -> vector<8x64xf32>
    %c0_9 = arith.constant 0 : index
    %c0_10 = arith.constant 0 : index
    %13 = vector.load %arg5[%c0_9, %c0_10] : memref<1x64xf32, #tpu.memory_space<vmem>>, vector<1x64xf32>
    %14 = vector.broadcast %13 : vector<1x64xf32> to vector<8x64xf32>
    %15 = arith.addf %12, %14 : vector<8x64xf32>
    %16 = arith.negf %15 : vector<8x64xf32>
    %17 = math.exp %16 : vector<8x64xf32>
    %cst_11 = arith.constant 1.000000e+00 : f32
    %18 = vector.broadcast %cst_11 : f32 to vector<8x64xf32>
    %19 = arith.addf %18, %17 : vector<8x64xf32>
    %20 = arith.divf %18, %19 : vector<8x64xf32>
    %c0_12 = arith.constant 0 : index
    %c0_13 = arith.constant 0 : index
    %21 = vector.load %arg6[%c0_12, %c0_13] : memref<64x4xf32, #tpu.memory_space<vmem>>, vector<64x4xf32>
    %cst_14 = arith.constant dense<0.000000e+00> : vector<8x4xf32>
    %22 = tpu.matmul %20, %21, %cst_14 {dimension_numbers = #tpu.dot_dimension_numbers<[1], [0], [0], [1], [0, 0, 1, 1], [], []>} : vector<8x64xf32>, vector<64x4xf32>, vector<8x4xf32> -> vector<8x4xf32>
    %c0_15 = arith.constant 0 : index
    %c0_16 = arith.constant 0 : index
    %23 = vector.load %arg7[%c0_15, %c0_16] : memref<1x4xf32, #tpu.memory_space<vmem>>, vector<1x4xf32>
    %24 = vector.broadcast %23 : vector<1x4xf32> to vector<8x4xf32>
    %25 = arith.addf %22, %24 : vector<8x4xf32>
    %26 = tpu.iota {dimensions = array<i32: 1>} : vector<8x4xi32>
    %c2_i32 = arith.constant 2 : i32
    %27 = vector.broadcast %c2_i32 : i32 to vector<8x4xi32>
    %28 = arith.cmpi slt, %26, %27 : vector<8x4xi32>
    %29 = arith.negf %25 : vector<8x4xf32>
    %30 = math.exp %29 : vector<8x4xf32>
    %cst_17 = arith.constant 1.000000e+00 : f32
    %31 = vector.broadcast %cst_17 : f32 to vector<8x4xf32>
    %32 = arith.addf %31, %30 : vector<8x4xf32>
    %33 = arith.divf %31, %32 : vector<8x4xf32>
    %34 = arith.select %28, %25, %33 : vector<8x4xi1>, vector<8x4xf32>
    %c0_18 = arith.constant 0 : index
    %c0_19 = arith.constant 0 : index
    %35 = vector.load %arg8[%c0_18, %c0_19] : memref<8x4xf32, #tpu.memory_space<vmem>>, vector<8x4xf32>
    tpu.vector_store %arg8[%c0_18, %c0_19], %34 {strides = array<i32>} : memref<8x4xf32, #tpu.memory_space<vmem>>, vector<8x4xf32>,
    return
  }
  func.func @transform_0(%arg0: i32) -> (i32, i32) {
    %c0_i32 = arith.constant 0 : i32
    %c0_i32_0 = arith.constant 0 : i32
    return %arg0, %c0_i32 : i32, i32
  }
  func.func @transform_1(%arg0: i32) -> (i32, i32) {
    %c0_i32 = arith.constant 0 : i32
    %c0_i32_0 = arith.constant 0 : i32
    %c0_i32_1 = arith.constant 0 : i32
    return %c0_i32, %c0_i32_0 : i32, i32
  }
  func.func @transform_2(%arg0: i32) -> (i32, i32) {
    %c0_i32 = arith.constant 0 : i32
    %c0_i32_0 = arith.constant 0 : i32
    %c0_i32_1 = arith.constant 0 : i32
    return %c0_i32, %c0_i32_0 : i32, i32
  }
  func.func @transform_3(%arg0: i32) -> (i32, i32) {
    %c0_i32 = arith.constant 0 : i32
    %c0_i32_0 = arith.constant 0 : i32
    %c0_i32_1 = arith.constant 0 : i32
    return %c0_i32, %c0_i32_0 : i32, i32
  }
  func.func @transform_4(%arg0: i32) -> (i32, i32) {
    %c0_i32 = arith.constant 0 : i32
    %c0_i32_0 = arith.constant 0 : i32
    %c0_i32_1 = arith.constant 0 : i32
    return %c0_i32, %c0_i32_0 : i32, i32
  }
  func.func @transform_5(%arg0: i32) -> (i32, i32) {
    %c0_i32 = arith.constant 0 : i32
    %c0_i32_0 = arith.constant 0 : i32
    %c0_i32_1 = arith.constant 0 : i32
    return %c0_i32, %c0_i32_0 : i32, i32
  }
  func.func @transform_6(%arg0: i32) -> (i32, i32) {
    %c0_i32 = arith.constant 0 : i32
    %c0_i32_0 = arith.constant 0 : i32
    %c0_i32_1 = arith.constant 0 : i32
    return %c0_i32, %c0_i32_0 : i32, i32
  }
  func.func @transform_7(%arg0: i32) -> (i32, i32) {
    %c0_i32 = arith.constant 0 : i32
    %c0_i32_0 = arith.constant 0 : i32
    return %arg0, %c0_i32 : i32, i32
  }
}

</mosaic_0001>

<llo_original>
// kernel: tpu_custom_call.1
$region0: #{tpu_custom_call.1}
  #allocation0 [shape = 'u32[]', space=smem, size = 0x4, offset = 0x4, fixed_abs, tag = 'smem constant byte address 0x4 - core index']
  #allocation1 [shape = 'u32[144,128]{1,0:T(1,128)}', space=vmem, size = 0x12000, scoped, tag = 'internal scratch']
  %s0 = inlined_call_operand.vmem [shape: f32[8,784], index: 0, kind: input, shape index: {}]
  %s1 = inlined_call_operand.hbm [shape: f32[784,128], index: 1, kind: input, shape index: {}]
  %s2 = inlined_call_operand.vmem [shape: f32[1,128], index: 2, kind: input, shape index: {}]
  %s3 = inlined_call_operand.vmem [shape: f32[128,64], index: 3, kind: input, shape index: {}]
  %s4 = inlined_call_operand.vmem [shape: f32[1,64], index: 4, kind: input, shape index: {}]
  %s5 = inlined_call_operand.vmem [shape: f32[64,4], index: 5, kind: input, shape index: {}]
  %s6 = inlined_call_operand.vmem [shape: f32[1,4], index: 6, kind: input, shape index: {}]
  %s7 = inlined_call_operand.vmem [shape: f32[8,4], index: 7, kind: output, shape index: {}]
  %s8 = sld [smem:[#allocation0]]
  $region42: #{tpu_custom_call.1} parent=0
    _
  %s10 = ssub.s32 1, %s8
  %s11 = scalar_select 0, %s10, %s8
  $region1: #{tpu_custom_call.1} parent=0
    #allocation2 [shape = 'u8[401408]{0}', space=vmem, size = 0x62000, scoped, tag = 'input window, operand 1, single buffered']
    #allocation3 [shape = 's32[1]{0}', space=sflag, size = 0x4, scoped, tag = 'scoped memory for tpu_custom_call.1']
    %12 = vsyncpa [#allocation3], 0
    // Predicated region
    $region2: #{tpu_custom_call.1} parent=1 // pred_check
      _
    $region3: #{tpu_custom_call.1} parent=1 // pred_check_branch
      %14 = sbr.rel (0) target = $region5
    $region4: #{tpu_custom_call.1} parent=1 // pred_region
      _
    $region5: #{tpu_custom_call.1} parent=1 // pred_fallthru
      _
    // Predicated region
    $region6: #{tpu_custom_call.1} parent=1 // pred_check
      _
    $region7: #{tpu_custom_call.1} parent=1 // pred_check_branch
      %16 = sbr.rel (0) target = $region9
    $region8: #{tpu_custom_call.1} parent=1 // pred_region
      %s18 = ssub.s32 12544, 12544
      %19 = vsyncadd [#allocation3], %s18
      %s20 = sshll.u32 [#allocation2], 4
      %s21 = int_to_ptr.vmem [resolvable:$true] %s20
      %26 = dma.hbm_to_vmem [thread:$0]  %s1, 12544, %s21, [#allocation3], 128, 128, 8
    $region9: #{tpu_custom_call.1} parent=1 // pred_fallthru
      _
    // Predicated region
    $region10: #{tpu_custom_call.1} parent=1 // pred_check
      _
    $region11: #{tpu_custom_call.1} parent=1 // pred_check_branch
      %28 = sbr.rel (0) target = $region13
    $region12: #{tpu_custom_call.1} parent=1 // pred_region
      _
    $region13: #{tpu_custom_call.1} parent=1 // pred_fallthru
      _
    // Predicated region
    $region14: #{tpu_custom_call.1} parent=1 // pred_check
      _
    $region15: #{tpu_custom_call.1} parent=1 // pred_check_branch
      %30 = sbr.rel (0) target = $region17
    $region16: #{tpu_custom_call.1} parent=1 // pred_region
      _
    $region17: #{tpu_custom_call.1} parent=1 // pred_fallthru
      _
    // Predicated region
    $region18: #{tpu_custom_call.1} parent=1 // pred_check
      _
    $region19: #{tpu_custom_call.1} parent=1 // pred_check_branch
      %32 = sbr.rel (0) target = $region21
    $region20: #{tpu_custom_call.1} parent=1 // pred_region
      _
    $region21: #{tpu_custom_call.1} parent=1 // pred_fallthru
      _
    // Predicated region
    $region22: #{tpu_custom_call.1} parent=1 // pred_check
      _
    $region23: #{tpu_custom_call.1} parent=1 // pred_check_branch
      %34 = sbr.rel (0) target = $region25
    $region24: #{tpu_custom_call.1} parent=1 // pred_region
      _
    $region25: #{tpu_custom_call.1} parent=1 // pred_fallthru
      _
    // Predicated region
    $region26: #{tpu_custom_call.1} parent=1 // pred_check
      _
    $region27: #{tpu_custom_call.1} parent=1 // pred_check_branch
      %36 = sbr.rel (0) target = $region29
    $region28: #{tpu_custom_call.1} parent=1 // pred_region
      _
    $region29: #{tpu_custom_call.1} parent=1 // pred_fallthru
      _
    // Predicated region
    $region30: #{tpu_custom_call.1} parent=1 // pred_check
      _
    $region31: #{tpu_custom_call.1} parent=1 // pred_check_branch
      %38 = sbr.rel (0) target = $region33
    $region32: #{tpu_custom_call.1} parent=1 // pred_region
      %39 = dma.done [#allocation3], 12544
    $region33: #{tpu_custom_call.1} parent=1 // pred_fallthru
      _
    %v40 = vld [vmem:[%s0] sm:$0xff]
    %v41 = vld [vmem:[%s0 + $0x8] sm:$0xff]
    %v42 = vld [vmem:[%s0 + $0x10] sm:$0xff]
    %v43 = vld [vmem:[%s0 + $0x18] sm:$0xff]
    %v44 = vld [vmem:[%s0 + $0x20] sm:$0xff]
    %v45 = vld [vmem:[%s0 + $0x28] sm:$0xff]
    %v46 = vld [vmem:[%s0 + $0x30] sm:$0xff]
    %v47 = vld [vmem:[#allocation2] sm:$0xff]
    %v48 = vld [vmem:[#allocation2 + $0x8] sm:$0xff]
    %v49 = vld [vmem:[#allocation2 + $0x10] sm:$0xff]
    %v50 = vld [vmem:[#allocation2 + $0x18] sm:$0xff]
    %v51 = vld [vmem:[#allocation2 + $0x20] sm:$0xff]
    %v52 = vld [vmem:[#allocation2 + $0x28] sm:$0xff]
    %v53 = vld [vmem:[#allocation2 + $0x30] sm:$0xff]
    %v54 = vld [vmem:[#allocation2 + $0x38] sm:$0xff]
    %v55 = vld [vmem:[#allocation2 + $0x40] sm:$0xff]
    %v56 = vld [vmem:[#allocation2 + $0x48] sm:$0xff]
    %v57 = vld [vmem:[#allocation2 + $0x50] sm:$0xff]
    %v58 = vld [vmem:[#allocation2 + $0x58] sm:$0xff]
    %v59 = vld [vmem:[#allocation2 + $0x60] sm:$0xff]
    %v60 = vld [vmem:[#allocation2 + $0x68] sm:$0xff]
    %v61 = vld [vmem:[#allocation2 + $0x70] sm:$0xff]
    %v62 = vld [vmem:[#allocation2 + $0x78] sm:$0xff]
    %v63 = vld [vmem:[#allocation2 + $0x80] sm:$0xff]
    %v64 = vld [vmem:[#allocation2 + $0x88] sm:$0xff]
    %v65 = vld [vmem:[#allocation2 + $0x90] sm:$0xff]
    %v66 = vld [vmem:[#allocation2 + $0x98] sm:$0xff]
    %v67 = vld [vmem:[#allocation2 + $0xa0] sm:$0xff]
    %v68 = vld [vmem:[#allocation2 + $0xa8] sm:$0xff]
    %v69 = vld [vmem:[#allocation2 + $0xb0] sm:$0xff]
    %v70 = vld [vmem:[#allocation2 + $0xb8] sm:$0xff]
    %v71 = vld [vmem:[#allocation2 + $0xc0] sm:$0xff]
    %v72 = vld [vmem:[#allocation2 + $0xc8] sm:$0xff]
    %v73 = vld [vmem:[#allocation2 + $0xd0] sm:$0xff]
    %v74 = vld [vmem:[#allocation2 + $0xd8] sm:$0xff]
    %v75 = vld [vmem:[#allocation2 + $0xe0] sm:$0xff]
    %v76 = vld [vmem:[#allocation2 + $0xe8] sm:$0xff]
    %v77 = vld [vmem:[#allocation2 + $0xf0] sm:$0xff]
    %v78 = vld [vmem:[#allocation2 + $0xf8] sm:$0xff]
    %v79 = vld [vmem:[#allocation2 + $0x100] sm:$0xff]
    %v80 = vld [vmem:[#allocation2 + $0x108] sm:$0xff]
    %v81 = vld [vmem:[#allocation2 + $0x110] sm:$0xff]
    %v82 = vld [vmem:[#allocation2 + $0x118] sm:$0xff]
    %v83 = vld [vmem:[#allocation2 + $0x120] sm:$0xff]
    %v84 = vld [vmem:[#allocation2 + $0x128] sm:$0xff]
    %v85 = vld [vmem:[#allocation2 + $0x130] sm:$0xff]
    %v86 = vld [vmem:[#allocation2 + $0x138] sm:$0xff]
    %v87 = vld [vmem:[#allocation2 + $0x140] sm:$0xff]
    %v88 = vld [vmem:[#allocation2 + $0x148] sm:$0xff]
    %v89 = vld [vmem:[#allocation2 + $0x150] sm:$0xff]
    %v90 = vld [vmem:[#allocation2 + $0x158] sm:$0xff]
    %v91 = vld [vmem:[#allocation2 + $0x160] sm:$0xff]
    %v92 = vld [vmem:[#allocation2 + $0x168] sm:$0xff]
    %v93 = vld [vmem:[#allocation2 + $0x170] sm:$0xff]
    %v94 = vld [vmem:[#allocation2 + $0x178] sm:$0xff]
    %v95 = vld [vmem:[#allocation2 + $0x180] sm:$0xff]
    %v96 = vld [vmem:[#allocation2 + $0x188] sm:$0xff]
    %v97 = vld [vmem:[#allocation2 + $0x190] sm:$0xff]
    %v98 = vld [vmem:[#allocation2 + $0x198] sm:$0xff]
    %v99 = vld [vmem:[#allocation2 + $0x1a0] sm:$0xff]
    %v100 = vld [vmem:[#allocation2 + $0x1a8] sm:$0xff]
    %v101 = vld [vmem:[#allocation2 + $0x1b0] sm:$0xff]
    %v102 = vld [vmem:[#allocation2 + $0x1b8] sm:$0xff]
    %v103 = vld [vmem:[#allocation2 + $0x1c0] sm:$0xff]
    %v104 = vld [vmem:[#allocation2 + $0x1c8] sm:$0xff]
    %v105 = vld [vmem:[#allocation2 + $0x1d0] sm:$0xff]
    %v106 = vld [vmem:[#allocation2 + $0x1d8] sm:$0xff]
    %v107 = vld [vmem:[#allocation2 + $0x1e0] sm:$0xff]
    %v108 = vld [vmem:[#allocation2 + $0x1e8] sm:$0xff]
    %v109 = vld [vmem:[#allocation2 + $0x1f0] sm:$0xff]
    %v110 = vld [vmem:[#allocation2 + $0x1f8] sm:$0xff]
    %v111 = vld [vmem:[#allocation2 + $0x200] sm:$0xff]
    %v112 = vld [vmem:[#allocation2 + $0x208] sm:$0xff]
    %v113 = vld [vmem:[#allocation2 + $0x210] sm:$0xff]
    %v114 = vld [vmem:[#allocation2 + $0x218] sm:$0xff]
    %v115 = vld [vmem:[#allocation2 + $0x220] sm:$0xff]
    %v116 = vld [vmem:[#allocation2 + $0x228] sm:$0xff]
    %v117 = vld [vmem:[#allocation2 + $0x230] sm:$0xff]
    %v118 = vld [vmem:[#allocation2 + $0x238] sm:$0xff]
    %v119 = vld [vmem:[#allocation2 + $0x240] sm:$0xff]
    %v120 = vld [vmem:[#allocation2 + $0x248] sm:$0xff]
    %v121 = vld [vmem:[#allocation2 + $0x250] sm:$0xff]
    %v122 = vld [vmem:[#allocation2 + $0x258] sm:$0xff]
    %v123 = vld [vmem:[#allocation2 + $0x260] sm:$0xff]
    %v124 = vld [vmem:[#allocation2 + $0x268] sm:$0xff]
    %v125 = vld [vmem:[#allocation2 + $0x270] sm:$0xff]
    %v126 = vld [vmem:[#allocation2 + $0x278] sm:$0xff]
    %v127 = vld [vmem:[#allocation2 + $0x280] sm:$0xff]
    %v128 = vld [vmem:[#allocation2 + $0x288] sm:$0xff]
    %v129 = vld [vmem:[#allocation2 + $0x290] sm:$0xff]
    %v130 = vld [vmem:[#allocation2 + $0x298] sm:$0xff]
    %v131 = vld [vmem:[#allocation2 + $0x2a0] sm:$0xff]
    %v132 = vld [vmem:[#allocation2 + $0x2a8] sm:$0xff]
    %v133 = vld [vmem:[#allocation2 + $0x2b0] sm:$0xff]
    %v134 = vld [vmem:[#allocation2 + $0x2b8] sm:$0xff]
    %v135 = vld [vmem:[#allocation2 + $0x2c0] sm:$0xff]
    %v136 = vld [vmem:[#allocation2 + $0x2c8] sm:$0xff]
    %v137 = vld [vmem:[#allocation2 + $0x2d0] sm:$0xff]
    %v138 = vld [vmem:[#allocation2 + $0x2d8] sm:$0xff]
    %v139 = vld [vmem:[#allocation2 + $0x2e0] sm:$0xff]
    %v140 = vld [vmem:[#allocation2 + $0x2e8] sm:$0xff]
    %v141 = vld [vmem:[#allocation2 + $0x2f0] sm:$0xff]
    %v142 = vld [vmem:[#allocation2 + $0x2f8] sm:$0xff]
    %v143 = vld [vmem:[#allocation2 + $0x300] sm:$0xff]
    %v144 = vld [vmem:[#allocation2 + $0x308] sm:$0xff]
    %v145 = vld [vmem:[%s2] sm:$0x1]
    %v147 = vlaneseq
    %v148 = vshrl.u32 %v147, 7
    %v149 = vsub.s32 0, %v148
    %v150 = vrot.slane %v145, %v149
    %vm152 = vcmask 130048
    %v154 = vsel %vm152, %v46, 0
    %156 = vmatprep.subr.mxu0 0.0
    %157 = vmatpush1.msra.mxu0 %v47
    %158 = vmatprep.subr.mxu0 0.0
    %159 = vmatpush1.msra.mxu0 %v48
    %160 = vmatprep.subr.mxu0 0.0
    %161 = vmatpush1.msra.mxu0 %v49
    %162 = vmatprep.subr.mxu0 0.0
    %163 = vmatpush1.msra.mxu0 %v50
    %164 = vmatprep.subr.mxu0 0.0
    %165 = vmatpush1.msra.mxu0 %v51
    %166 = vmatprep.subr.mxu0 0.0
    %167 = vmatpush1.msra.mxu0 %v52
    %168 = vmatprep.subr.mxu0 0.0
    %169 = vmatpush1.msra.mxu0 %v53
    %170 = vmatprep.subr.mxu0 0.0
    %171 = vmatpush1.msra.mxu0 %v54
    %172 = vmatprep.subr.mxu0 0.0
    %173 = vmatpush1.msra.mxu0 %v55
    %174 = vmatprep.subr.mxu0 0.0
    %175 = vmatpush1.msra.mxu0 %v56
    %176 = vmatprep.subr.mxu0 0.0
    %177 = vmatpush1.msra.mxu0 %v57
    %178 = vmatprep.subr.mxu0 0.0
    %179 = vmatpush1.msra.mxu0 %v58
    %180 = vmatprep.subr.mxu0 0.0
    %181 = vmatpush1.msra.mxu0 %v59
    %182 = vmatprep.subr.mxu0 0.0
    %183 = vmatpush1.msra.mxu0 %v60
    %184 = vmatprep.subr.mxu0 0.0
    %185 = vmatpush1.msra.mxu0 %v61
    %186 = vmatprep.subr.mxu0 0.0
    %187 = vmatpush1.msra.mxu0 %v62
    %188 = vmatprep.subr.mxu0 0.0
    %189 = vmatpush1.msra.mxu0 %v63
    %190 = vmatprep.subr.mxu0 0.0
    %191 = vmatpush1.msra.mxu0 %v64
    %192 = vmatprep.subr.mxu0 0.0
    %193 = vmatpush1.msra.mxu0 %v65
    %194 = vmatprep.subr.mxu0 0.0
    %195 = vmatpush1.msra.mxu0 %v66
    %196 = vmatprep.subr.mxu0 0.0
    %197 = vmatpush1.msra.mxu0 %v67
    %198 = vmatprep.subr.mxu0 0.0
    %199 = vmatpush1.msra.mxu0 %v68
    %200 = vmatprep.subr.mxu0 0.0
    %201 = vmatpush1.msra.mxu0 %v69
    %202 = vmatprep.subr.mxu0 0.0
    %203 = vmatpush1.msra.mxu0 %v70
    %204 = vmatprep.subr.mxu0 0.0
    %205 = vmatpush1.msra.mxu0 %v71
    %206 = vmatprep.subr.mxu0 0.0
    %207 = vmatpush1.msra.mxu0 %v72
    %208 = vmatprep.subr.mxu0 0.0
    %209 = vmatpush1.msra.mxu0 %v73
    %210 = vmatprep.subr.mxu0 0.0
    %211 = vmatpush1.msra.mxu0 %v74
    %212 = vmatprep.subr.mxu0 0.0
    %213 = vmatpush1.msra.mxu0 %v75
    %214 = vmatprep.subr.mxu0 0.0
    %215 = vmatpush1.msra.mxu0 %v76
    %216 = vmatprep.subr.mxu0 0.0
    %217 = vmatpush1.msra.mxu0 %v77
    %218 = vmatprep.subr.mxu0 0.0
    %219 = vmatpush1.msra.mxu0 %v78
    %220 = vmatprep.mubr.f32.mxu0 %v41
    %221 = vmatmul.mubr.f32.gmra.mrb[0].mxu0 %v40
    %v222 = vpop.f32.mrb[0].mxu0
    %v223 = vadd.f32 %v150, %v222
    %v224 = vpop.f32.mrb[0].mxu0
    %225 = vdwg.mxu0
    %226 = vmatprep.subr.mxu0 0.0
    %227 = vmatpush1.msra.mxu0 %v79
    %228 = vmatprep.subr.mxu0 0.0
    %229 = vmatpush1.msra.mxu0 %v80
    %230 = vmatprep.subr.mxu0 0.0
    %231 = vmatpush1.msra.mxu0 %v81
    %232 = vmatprep.subr.mxu0 0.0
    %233 = vmatpush1.msra.mxu0 %v82
    %234 = vmatprep.subr.mxu0 0.0
    %235 = vmatpush1.msra.mxu0 %v83
    %236 = vmatprep.subr.mxu0 0.0
    %237 = vmatpush1.msra.mxu0 %v84
    %238 = vmatprep.subr.mxu0 0.0
    %239 = vmatpush1.msra.mxu0 %v85
    %240 = vmatprep.subr.mxu0 0.0
    %241 = vmatpush1.msra.mxu0 %v86
    %242 = vmatprep.subr.mxu0 0.0
    %243 = vmatpush1.msra.mxu0 %v87
    %244 = vmatprep.subr.mxu0 0.0
    %245 = vmatpush1.msra.mxu0 %v88
    %246 = vmatprep.subr.mxu0 0.0
    %247 = vmatpush1.msra.mxu0 %v89
    %248 = vmatprep.subr.mxu0 0.0
    %249 = vmatpush1.msra.mxu0 %v90
    %250 = vmatprep.subr.mxu0 0.0
    %251 = vmatpush1.msra.mxu0 %v91
    %252 = vmatprep.subr.mxu0 0.0
    %253 = vmatpush1.msra.mxu0 %v92
    %254 = vmatprep.subr.mxu0 0.0
    %255 = vmatpush1.msra.mxu0 %v93
    %256 = vmatprep.subr.mxu0 0.0
    %257 = vmatpush1.msra.mxu0 %v94
    %258 = vmatprep.subr.mxu0 0.0
    %259 = vmatpush1.msra.mxu0 %v95
    %260 = vmatprep.subr.mxu0 0.0
    %261 = vmatpush1.msra.mxu0 %v96
    %262 = vmatprep.subr.mxu0 0.0
    %263 = vmatpush1.msra.mxu0 %v97
    %264 = vmatprep.subr.mxu0 0.0
    %265 = vmatpush1.msra.mxu0 %v98
    %266 = vmatprep.subr.mxu0 0.0
    %267 = vmatpush1.msra.mxu0 %v99
    %268 = vmatprep.subr.mxu0 0.0
    %269 = vmatpush1.msra.mxu0 %v100
    %270 = vmatprep.subr.mxu0 0.0
    %271 = vmatpush1.msra.mxu0 %v101
    %272 = vmatprep.subr.mxu0 0.0
    %273 = vmatpush1.msra.mxu0 %v102
    %274 = vmatprep.subr.mxu0 0.0
    %275 = vmatpush1.msra.mxu0 %v103
    %276 = vmatprep.subr.mxu0 0.0
    %277 = vmatpush1.msra.mxu0 %v104
    %278 = vmatprep.subr.mxu0 0.0
    %279 = vmatpush1.msra.mxu0 %v105
    %280 = vmatprep.subr.mxu0 0.0
    %281 = vmatpush1.msra.mxu0 %v106
    %282 = vmatprep.subr.mxu0 0.0
    %283 = vmatpush1.msra.mxu0 %v107
    %284 = vmatprep.subr.mxu0 0.0
    %285 = vmatpush1.msra.mxu0 %v108
    %286 = vmatprep.subr.mxu0 0.0
    %287 = vmatpush1.msra.mxu0 %v109
    %288 = vmatprep.subr.mxu0 0.0
    %289 = vmatpush1.msra.mxu0 %v110
    %290 = vmatprep.mubr.f32.mxu0 %v43
    %291 = vmatmul.mubr.f32.gmra.mrb[0].mxu0 %v42
    %v292 = vpop.f32.mrb[0].mxu0
    %v293 = vadd.f32 %v223, %v292
    %v294 = vpop.f32.mrb[0].mxu0
    %295 = vdwg.mxu0
    %296 = vmatprep.subr.mxu0 0.0
    %297 = vmatpush1.msra.mxu0 %v111
    %298 = vmatprep.subr.mxu0 0.0
    %299 = vmatpush1.msra.mxu0 %v112
    %300 = vmatprep.subr.mxu0 0.0
    %301 = vmatpush1.msra.mxu0 %v113
    %302 = vmatprep.subr.mxu0 0.0
    %303 = vmatpush1.msra.mxu0 %v114
    %304 = vmatprep.subr.mxu0 0.0
    %305 = vmatpush1.msra.mxu0 %v115
    %306 = vmatprep.subr.mxu0 0.0
    %307 = vmatpush1.msra.mxu0 %v116
    %308 = vmatprep.subr.mxu0 0.0
    %309 = vmatpush1.msra.mxu0 %v117
    %310 = vmatprep.subr.mxu0 0.0
    %311 = vmatpush1.msra.mxu0 %v118
    %312 = vmatprep.subr.mxu0 0.0
    %313 = vmatpush1.msra.mxu0 %v119
    %314 = vmatprep.subr.mxu0 0.0
    %315 = vmatpush1.msra.mxu0 %v120
    %316 = vmatprep.subr.mxu0 0.0
    %317 = vmatpush1.msra.mxu0 %v121
    %318 = vmatprep.subr.mxu0 0.0
    %319 = vmatpush1.msra.mxu0 %v122
    %320 = vmatprep.subr.mxu0 0.0
    %321 = vmatpush1.msra.mxu0 %v123
    %322 = vmatprep.subr.mxu0 0.0
    %323 = vmatpush1.msra.mxu0 %v124
    %324 = vmatprep.subr.mxu0 0.0
    %325 = vmatpush1.msra.mxu0 %v125
    %326 = vmatprep.subr.mxu0 0.0
    %327 = vmatpush1.msra.mxu0 %v126
    %328 = vmatprep.subr.mxu0 0.0
    %329 = vmatpush1.msra.mxu0 %v127
    %330 = vmatprep.subr.mxu0 0.0
    %331 = vmatpush1.msra.mxu0 %v128
    %332 = vmatprep.subr.mxu0 0.0
    %333 = vmatpush1.msra.mxu0 %v129
    %334 = vmatprep.subr.mxu0 0.0
    %335 = vmatpush1.msra.mxu0 %v130
    %336 = vmatprep.subr.mxu0 0.0
    %337 = vmatpush1.msra.mxu0 %v131
    %338 = vmatprep.subr.mxu0 0.0
    %339 = vmatpush1.msra.mxu0 %v132
    %340 = vmatprep.subr.mxu0 0.0
    %341 = vmatpush1.msra.mxu0 %v133
    %342 = vmatprep.subr.mxu0 0.0
    %343 = vmatpush1.msra.mxu0 %v134
    %344 = vmatprep.subr.mxu0 0.0
    %345 = vmatpush1.msra.mxu0 %v135
    %346 = vmatprep.subr.mxu0 0.0
    %347 = vmatpush1.msra.mxu0 %v136
    %348 = vmatprep.subr.mxu0 0.0
    %349 = vmatpush1.msra.mxu0 %v137
    %350 = vmatprep.subr.mxu0 0.0
    %351 = vmatpush1.msra.mxu0 %v138
    %352 = vmatprep.subr.mxu0 0.0
    %353 = vmatpush1.msra.mxu0 %v139
    %354 = vmatprep.subr.mxu0 0.0
    %355 = vmatpush1.msra.mxu0 %v140
    %356 = vmatprep.subr.mxu0 0.0
    %357 = vmatpush1.msra.mxu0 %v141
    %358 = vmatprep.subr.mxu0 0.0
    %359 = vmatpush1.msra.mxu0 %v142
    %360 = vmatprep.mubr.f32.mxu0 %v45
    %361 = vmatmul.mubr.f32.gmra.mrb[0].mxu0 %v44
    %v362 = vpop.f32.mrb[0].mxu0
    %v363 = vadd.f32 %v293, %v362
    %v364 = vpop.f32.mrb[0].mxu0
    %365 = vdwg.mxu0
    %366 = vmatprep.subr.mxu0 0.0
    %367 = vmatpush1.msra.mxu0 %v143
    %368 = vmatprep.subr.mxu0 0.0
    %369 = vmatpush1.msra.mxu0 %v144
    %370 = vmatprep.subr.mxu0 0.0
    %371 = vmatpush1.msra.mxu0 0.0
    %372 = vmatprep.subr.mxu0 0.0
    %373 = vmatpush1.msra.mxu0 0.0
    %374 = vmatprep.subr.mxu0 0.0
    %375 = vmatpush1.msra.mxu0 0.0
    %376 = vmatprep.subr.mxu0 0.0
    %377 = vmatpush1.msra.mxu0 0.0
    %378 = vmatprep.subr.mxu0 0.0
    %379 = vmatpush1.msra.mxu0 0.0
    %380 = vmatprep.subr.mxu0 0.0
    %381 = vmatpush1.msra.mxu0 0.0
    %382 = vmatprep.subr.mxu0 0.0
    %383 = vmatpush1.msra.mxu0 0.0
    %384 = vmatprep.subr.mxu0 0.0
    %385 = vmatpush1.msra.mxu0 0.0
    %386 = vmatprep.subr.mxu0 0.0
    %387 = vmatpush1.msra.mxu0 0.0
    %388 = vmatprep.subr.mxu0 0.0
    %389 = vmatpush1.msra.mxu0 0.0
    %390 = vmatprep.subr.mxu0 0.0
    %391 = vmatpush1.msra.mxu0 0.0
    %392 = vmatprep.subr.mxu0 0.0
    %393 = vmatpush1.msra.mxu0 0.0
    %394 = vmatprep.subr.mxu0 0.0
    %395 = vmatpush1.msra.mxu0 0.0
    %396 = vmatprep.subr.mxu0 0.0
    %397 = vmatpush1.msra.mxu0 0.0
    %398 = vmatprep.subr.mxu0 0.0
    %399 = vmatpush1.msra.mxu0 0.0
    %400 = vmatprep.subr.mxu0 0.0
    %401 = vmatpush1.msra.mxu0 0.0
    %402 = vmatprep.subr.mxu0 0.0
    %403 = vmatpush1.msra.mxu0 0.0
    %404 = vmatprep.subr.mxu0 0.0
    %405 = vmatpush1.msra.mxu0 0.0
    %406 = vmatprep.subr.mxu0 0.0
    %407 = vmatpush1.msra.mxu0 0.0
    %408 = vmatprep.subr.mxu0 0.0
    %409 = vmatpush1.msra.mxu0 0.0
    %410 = vmatprep.subr.mxu0 0.0
    %411 = vmatpush1.msra.mxu0 0.0
    %412 = vmatprep.subr.mxu0 0.0
    %413 = vmatpush1.msra.mxu0 0.0
    %414 = vmatprep.subr.mxu0 0.0
    %415 = vmatpush1.msra.mxu0 0.0
    %416 = vmatprep.subr.mxu0 0.0
    %417 = vmatpush1.msra.mxu0 0.0
    %418 = vmatprep.subr.mxu0 0.0
    %419 = vmatpush1.msra.mxu0 0.0
    %420 = vmatprep.subr.mxu0 0.0
    %421 = vmatpush1.msra.mxu0 0.0
    %422 = vmatprep.subr.mxu0 0.0
    %423 = vmatpush1.msra.mxu0 0.0
    %424 = vmatprep.subr.mxu0 0.0
    %425 = vmatpush1.msra.mxu0 0.0
    %426 = vmatprep.subr.mxu0 0.0
    %427 = vmatpush1.msra.mxu0 0.0
    %428 = vmatprep.subr.mxu0 0.0
    %429 = vmatpush1.msra.mxu0 0.0
    %430 = vmatprep.mubr.f32.mxu0 0.0
    %431 = vmatmul.mubr.f32.gmra.mrb[0].mxu0 %v154
    %v432 = vpop.f32.mrb[0].mxu0
    %v433 = vadd.f32 %v363, %v432
    %v434 = vpop.f32.mrb[0].mxu0
    %435 = vdwg.mxu0
    %v436 = vxor.u32 %v433, 2147483648
    %v437 = vmul.f32 %v436, 1.442695
    %v438 = vpow.pop %v437
    %v439 = vadd.f32 %v438, 1.0
    %v440 = vrcp.pop %v439
    %v441 = vmul.f32 1.0, %v440
    %v442 = vld [vmem:[%s3] sm:$0xff]
    %v443 = vld [vmem:[%s3 + $0x8] sm:$0xff]
    %v444 = vld [vmem:[%s3 + $0x10] sm:$0xff]
    %v445 = vld [vmem:[%s3 + $0x18] sm:$0xff]
    %v446 = vld [vmem:[%s3 + $0x20] sm:$0xff]
    %v447 = vld [vmem:[%s3 + $0x28] sm:$0xff]
    %v448 = vld [vmem:[%s3 + $0x30] sm:$0xff]
    %v449 = vld [vmem:[%s3 + $0x38] sm:$0xff]
    %v450 = vld [vmem:[%s3 + $0x40] sm:$0xff]
    %v451 = vld [vmem:[%s3 + $0x48] sm:$0xff]
    %v452 = vld [vmem:[%s3 + $0x50] sm:$0xff]
    %v453 = vld [vmem:[%s3 + $0x58] sm:$0xff]
    %v454 = vld [vmem:[%s3 + $0x60] sm:$0xff]
    %v455 = vld [vmem:[%s3 + $0x68] sm:$0xff]
    %v456 = vld [vmem:[%s3 + $0x70] sm:$0xff]
    %v457 = vld [vmem:[%s3 + $0x78] sm:$0xff]
    %v458 = vld [vmem:[%s4] sm:$0x1]
    %v460 = vlaneseq
    %v461 = vshrl.u32 %v460, 7
    %v462 = vsub.s32 0, %v461
    %v463 = vrot.slane %v458, %v462
    %465 = vmatprep.subr.mxu0 0.0
    %466 = vmatpush1.msra.mxu0 %v442
    %467 = vmatprep.subr.mxu0 0.0
    %468 = vmatpush1.msra.mxu0 %v443
    %469 = vmatprep.subr.mxu0 0.0
    %470 = vmatpush1.msra.mxu0 %v444
    %471 = vmatprep.subr.mxu0 0.0
    %472 = vmatpush1.msra.mxu0 %v445
    %473 = vmatprep.subr.mxu0 0.0
    %474 = vmatpush1.msra.mxu0 %v446
    %475 = vmatprep.subr.mxu0 0.0
    %476 = vmatpush1.msra.mxu0 %v447
    %477 = vmatprep.subr.mxu0 0.0
    %478 = vmatpush1.msra.mxu0 %v448
    %479 = vmatprep.subr.mxu0 0.0
    %480 = vmatpush1.msra.mxu0 %v449
    %481 = vmatprep.subr.mxu0 0.0
    %482 = vmatpush1.msra.mxu0 %v450
    %483 = vmatprep.subr.mxu0 0.0
    %484 = vmatpush1.msra.mxu0 %v451
    %485 = vmatprep.subr.mxu0 0.0
    %486 = vmatpush1.msra.mxu0 %v452
    %487 = vmatprep.subr.mxu0 0.0
    %488 = vmatpush1.msra.mxu0 %v453
    %489 = vmatprep.subr.mxu0 0.0
    %490 = vmatpush1.msra.mxu0 %v454
    %491 = vmatprep.subr.mxu0 0.0
    %492 = vmatpush1.msra.mxu0 %v455
    %493 = vmatprep.subr.mxu0 0.0
    %494 = vmatpush1.msra.mxu0 %v456
    %495 = vmatprep.subr.mxu0 0.0
    %496 = vmatpush1.msra.mxu0 %v457
    %497 = vmatprep.subr.mxu0 0.0
    %498 = vmatpush1.msra.mxu0 0.0
    %499 = vmatprep.subr.mxu0 0.0
    %500 = vmatpush1.msra.mxu0 0.0
    %501 = vmatprep.subr.mxu0 0.0
    %502 = vmatpush1.msra.mxu0 0.0
    %503 = vmatprep.subr.mxu0 0.0
    %504 = vmatpush1.msra.mxu0 0.0
    %505 = vmatprep.subr.mxu0 0.0
    %506 = vmatpush1.msra.mxu0 0.0
    %507 = vmatprep.subr.mxu0 0.0
    %508 = vmatpush1.msra.mxu0 0.0
    %509 = vmatprep.subr.mxu0 0.0
    %510 = vmatpush1.msra.mxu0 0.0
    %511 = vmatprep.subr.mxu0 0.0
    %512 = vmatpush1.msra.mxu0 0.0
    %513 = vmatprep.subr.mxu0 0.0
    %514 = vmatpush1.msra.mxu0 0.0
    %515 = vmatprep.subr.mxu0 0.0
    %516 = vmatpush1.msra.mxu0 0.0
    %517 = vmatprep.subr.mxu0 0.0
    %518 = vmatpush1.msra.mxu0 0.0
    %519 = vmatprep.subr.mxu0 0.0
    %520 = vmatpush1.msra.mxu0 0.0
    %521 = vmatprep.subr.mxu0 0.0
    %522 = vmatpush1.msra.mxu0 0.0
    %523 = vmatprep.subr.mxu0 0.0
    %524 = vmatpush1.msra.mxu0 0.0
    %525 = vmatprep.subr.mxu0 0.0
    %526 = vmatpush1.msra.mxu0 0.0
    %527 = vmatprep.subr.mxu0 0.0
    %528 = vmatpush1.msra.mxu0 0.0
    %529 = vmatprep.mubr.f32.mxu0 0.0
    %530 = vmatmul.mubr.f32.gmra.mrb[0].mxu0 %v441
    %v531 = vpop.f32.mrb[0].mxu0
    %v532 = vadd.f32 %v463, %v531
    %v533 = vpop.f32.mrb[0].mxu0
    %534 = vdwg.mxu0
    %v535 = vxor.u32 %v532, 2147483648
    %v536 = vmul.f32 %v535, 1.442695
    %v537 = vpow.pop %v536
    %v538 = vadd.f32 %v537, 1.0
    %v539 = vrcp.pop %v538
    %v540 = vmul.f32 1.0, %v539
    %v541 = vld [vmem:[%s5] sm:$0xff]
    %v542 = vld [vmem:[%s5 + $0x8] sm:$0xff]
    %v543 = vld [vmem:[%s5 + $0x10] sm:$0xff]
    %v544 = vld [vmem:[%s5 + $0x18] sm:$0xff]
    %v545 = vld [vmem:[%s5 + $0x20] sm:$0xff]
    %v546 = vld [vmem:[%s5 + $0x28] sm:$0xff]
    %v547 = vld [vmem:[%s5 + $0x30] sm:$0xff]
    %v548 = vld [vmem:[%s5 + $0x38] sm:$0xff]
    %v549 = vld [vmem:[%s6] sm:$0x1]
    %v551 = vlaneseq
    %v552 = vshrl.u32 %v551, 7
    %v553 = vsub.s32 0, %v552
    %v554 = vrot.slane %v549, %v553
    %vm556 = vcmask 523264
    %v558 = vsel %vm556, %v540, 0
    %560 = vmatprep.subr.mxu0 0.0
    %561 = vmatpush1.msra.mxu0 %v541
    %562 = vmatprep.subr.mxu0 0.0
    %563 = vmatpush1.msra.mxu0 %v542
    %564 = vmatprep.subr.mxu0 0.0
    %565 = vmatpush1.msra.mxu0 %v543
    %566 = vmatprep.subr.mxu0 0.0
    %567 = vmatpush1.msra.mxu0 %v544
    %568 = vmatprep.subr.mxu0 0.0
    %569 = vmatpush1.msra.mxu0 %v545
    %570 = vmatprep.subr.mxu0 0.0
    %571 = vmatpush1.msra.mxu0 %v546
    %572 = vmatprep.subr.mxu0 0.0
    %573 = vmatpush1.msra.mxu0 %v547
    %574 = vmatprep.subr.mxu0 0.0
    %575 = vmatpush1.msra.mxu0 %v548
    %576 = vmatprep.subr.mxu0 0.0
    %577 = vmatpush1.msra.mxu0 0.0
    %578 = vmatprep.subr.mxu0 0.0
    %579 = vmatpush1.msra.mxu0 0.0
    %580 = vmatprep.subr.mxu0 0.0
    %581 = vmatpush1.msra.mxu0 0.0
    %582 = vmatprep.subr.mxu0 0.0
    %583 = vmatpush1.msra.mxu0 0.0
    %584 = vmatprep.subr.mxu0 0.0
    %585 = vmatpush1.msra.mxu0 0.0
    %586 = vmatprep.subr.mxu0 0.0
    %587 = vmatpush1.msra.mxu0 0.0
    %588 = vmatprep.subr.mxu0 0.0
    %589 = vmatpush1.msra.mxu0 0.0
    %590 = vmatprep.subr.mxu0 0.0
    %591 = vmatpush1.msra.mxu0 0.0
    %592 = vmatprep.subr.mxu0 0.0
    %593 = vmatpush1.msra.mxu0 0.0
    %594 = vmatprep.subr.mxu0 0.0
    %595 = vmatpush1.msra.mxu0 0.0
    %596 = vmatprep.subr.mxu0 0.0
    %597 = vmatpush1.msra.mxu0 0.0
    %598 = vmatprep.subr.mxu0 0.0
    %599 = vmatpush1.msra.mxu0 0.0
    %600 = vmatprep.subr.mxu0 0.0
    %601 = vmatpush1.msra.mxu0 0.0
    %602 = vmatprep.subr.mxu0 0.0
    %603 = vmatpush1.msra.mxu0 0.0
    %604 = vmatprep.subr.mxu0 0.0
    %605 = vmatpush1.msra.mxu0 0.0
    %606 = vmatprep.subr.mxu0 0.0
    %607 = vmatpush1.msra.mxu0 0.0
    %608 = vmatprep.subr.mxu0 0.0
    %609 = vmatpush1.msra.mxu0 0.0
    %610 = vmatprep.subr.mxu0 0.0
    %611 = vmatpush1.msra.mxu0 0.0
    %612 = vmatprep.subr.mxu0 0.0
    %613 = vmatpush1.msra.mxu0 0.0
    %614 = vmatprep.subr.mxu0 0.0
    %615 = vmatpush1.msra.mxu0 0.0
    %616 = vmatprep.subr.mxu0 0.0
    %617 = vmatpush1.msra.mxu0 0.0
    %618 = vmatprep.subr.mxu0 0.0
    %619 = vmatpush1.msra.mxu0 0.0
    %620 = vmatprep.subr.mxu0 0.0
    %621 = vmatpush1.msra.mxu0 0.0
    %622 = vmatprep.subr.mxu0 0.0
    %623 = vmatpush1.msra.mxu0 0.0
    %624 = vmatprep.mubr.f32.mxu0 0.0
    %625 = vmatmul.mubr.f32.gmra.mrb[0].mxu0 %v558
    %v626 = vpop.f32.mrb[0].mxu0
    %v627 = vadd.f32 %v554, %v626
    %v628 = vpop.f32.mrb[0].mxu0
    %629 = vdwg.mxu0
    %v630 = vlaneseq
    %v631 = vand.u32 %v630, 127
    %vm632 = vcmp.lt.s32.totalorder %v631, 2
    %v633 = vxor.u32 %v627, 2147483648
    %v634 = vmul.f32 %v633, 1.442695
    %v635 = vpow.pop %v634
    %v636 = vadd.f32 %v635, 1.0
    %v637 = vrcp.pop %v636
    %v638 = vmul.f32 1.0, %v637
    %v639 = vsel %vm632, %v627, %v638
    %vm640 = vcmask 31744
    %641 = vst.msk [vmem:[%s7] sm:$0xff] %vm640, %v639
    // Predicated region
    $region34: #{tpu_custom_call.1} parent=1 // pred_check
      _
    $region35: #{tpu_custom_call.1} parent=1 // pred_check_branch
      %643 = sbr.rel (0) target = $region37
    $region36: #{tpu_custom_call.1} parent=1 // pred_region
      _
    $region37: #{tpu_custom_call.1} parent=1 // pred_fallthru
      _
    // Predicated region
    $region38: #{tpu_custom_call.1} parent=1 // pred_check
      _
    $region39: #{tpu_custom_call.1} parent=1 // pred_check_branch
      %645 = sbr.rel (0) target = $region41
    $region40: #{tpu_custom_call.1} parent=1 // pred_region
      _
    $region41: #{tpu_custom_call.1} parent=1 // pred_fallthru
      _
    %646 = vsyncpa [#allocation3], 1

</llo_original>
